<compile_context>
chip_gen: v7x
topology: tpu7x:2x2x1
jax: 0.10.0
libtpu: 0.0.40
codegen_flags: <defaults>
</compile_context>

<pallas_src>
import math

import jax
import jax.numpy as jnp
from jax.experimental import pallas as pl
from jax.experimental.pallas import tpu as pltpu


_DEFAULT_BLOCK_BYTES = 4 * 1024 * 1024   # total HBM bytes touched per grid step
_MAX_TILE_ROWS = 4096                     # bounds the lane-padded (rows, 1) scale block
_VMEM_LIMIT_BYTES = 32 * 1024 * 1024      # explicit budget; safe on v5e/v6e/v7x


def _min_sublanes(dtype):
    """Minimum second-minor tile size: (8,128) f32, (16,128) bf16, (32,128) i8."""
    return max(8, 32 // jnp.dtype(dtype).itemsize)


def _drop_path_kernel(scale_ref, x_ref, o_ref):
    # out = x * scale ; scale is a (rows, 1) f32 column, broadcast over lanes.
    o_ref[...] = (x_ref[...] * scale_ref[...]).astype(o_ref.dtype)


def _drop_path_add_kernel(scale_ref, res_ref, branch_ref, o_ref):
    # out = residual + branch * scale  (fused residual-add epilogue, f32 math).
    o_ref[...] = (res_ref[...] + branch_ref[...] * scale_ref[...]).astype(o_ref.dtype)


def _per_sample_scale(key, drop_prob, batch):
    """float32 per-sample scale: floor(keep_prob + U[0,1)) / keep_prob."""
    keep_prob = 1.0 - drop_prob
    rand = jax.random.uniform(key, (batch,), dtype=jnp.float32)
    return jnp.floor(keep_prob + rand) / keep_prob


def _scaled_call(kernel, scale, operands, out_dtype, block_bytes, *, alias_first=False):
    """Shared wrapper: natural lane-dense (rows, D) layout, 1-D row-tile grid."""
    orig_shape = operands[0].shape
    assert operands[0].ndim >= 2, "expected at least (batch, features)"
    batch = orig_shape[0]
    feat = orig_shape[-1]
    rows_per_sample = math.prod(orig_shape[1:-1])    # == 1 for 2-D inputs
    rows = batch * rows_per_sample

    # Metadata-only reshapes (contiguous dims): no extra HBM pass, no padding.
    flat_ops = [a.reshape(rows, feat) for a in operands]
    # Per-row scale column (tiny: rows * 4 bytes), broadcast over lanes in-kernel.
    scale_rows = jnp.repeat(scale, rows_per_sample).reshape(rows, 1)

    dtypes = [a.dtype for a in operands] + [jnp.dtype(out_dtype)]
    min_sub = max(_min_sublanes(dt) for dt in dtypes)
    bytes_per_row = sum(feat * jnp.dtype(dt).itemsize for dt in dtypes)

    budget_rows = max(block_bytes // bytes_per_row, min_sub)
    budget_rows = min(budget_rows, _MAX_TILE_ROWS)
    if rows <= budget_rows:
        tile_rows = rows                                   # one exact full block
    else:
        tile_rows = max((budget_rows // min_sub) * min_sub, min_sub)

    grid = (pl.cdiv(rows, tile_rows),)                     # boundary block is masked
    data_spec = pl.BlockSpec((tile_rows, feat), lambda i: (i, 0))
    scale_spec = pl.BlockSpec((tile_rows, 1), lambda i: (i, 0))

    bytes_accessed = rows * bytes_per_row + rows * 4
    flops = rows * feat * len(operands)

    out = pl.pallas_call(
        kernel,
        out_shape=jax.ShapeDtypeStruct((rows, feat), out_dtype),
        grid=grid,
        in_specs=[scale_spec] + [data_spec] * len(flat_ops),
        out_specs=data_spec,
        input_output_aliases=({1: 0} if alias_first else {}),
        compiler_params=pltpu.CompilerParams(
            dimension_semantics=("parallel",),
            vmem_limit_bytes=_VMEM_LIMIT_BYTES,
        ),
        cost_estimate=pl.CostEstimate(
            flops=flops, transcendentals=0, bytes_accessed=bytes_accessed),
    )(scale_rows, *flat_ops)

    return out.reshape(orig_shape)


def drop_path(x, drop_prob, key, *, training=True, block_bytes=_DEFAULT_BLOCK_BYTES):
    """Standalone DropPath matching the PyTorch DropPath.forward semantics."""
    if drop_prob == 0.0 or not training:
        return x
    scale = _per_sample_scale(key, drop_prob, x.shape[0])
    return _scaled_call(_drop_path_kernel, scale, [x], x.dtype, block_bytes)


def drop_path_add(residual, branch, drop_prob, key, *, training=True,
                  block_bytes=_DEFAULT_BLOCK_BYTES, donate_residual=True):
    """Fused `residual + DropPath(branch)` as used inside EEGBlock."""
    if drop_prob == 0.0 or not training:
        return residual + branch
    assert residual.shape == branch.shape
    scale = _per_sample_scale(key, drop_prob, residual.shape[0])
    return _scaled_call(_drop_path_add_kernel, scale, [residual, branch],
                        residual.dtype, block_bytes, alias_first=donate_residual)


def drop_path_add_xla(residual, branch, drop_prob, key, *, training=True):
    """Plain-JAX epilogue for call sites inside a larger jit, so XLA fuses it
    directly into the producing matmul (review item 3)."""
    if drop_prob == 0.0 or not training:
        return residual + branch
    scale = _per_sample_scale(key, drop_prob, residual.shape[0])
    scale = scale.reshape((residual.shape[0],) + (1,) * (residual.ndim - 1))
    return (residual + branch * scale).astype(residual.dtype)


if __name__ == "__main__":
    key = jax.random.PRNGKey(0)
    k_x, k_branch, k_res, k_drop, k_xb, k_bb, k_x2, k_drop2 = jax.random.split(key, 8)

    drop_prob = 0.3
    keep_prob = 1.0 - drop_prob

    # --- small f32 shapes matching an EEGBlock activation (B, N, C) ---
    B, N, D = 2, 8, 32
    x = jax.random.normal(k_x, (B, N, D), dtype=jnp.float32)
    branch = jax.random.normal(k_branch, (B, N, D), dtype=jnp.float32)

    rand = jax.random.uniform(k_drop, (B,), dtype=jnp.float32)
    scale_vals = (jnp.floor(keep_prob + rand) / keep_prob).reshape(B, 1, 1)

    # standalone DropPath (training)
    out = jax.block_until_ready(drop_path(x, drop_prob, k_drop, training=True))
    assert jnp.allclose(out, x * scale_vals, atol=1e-6), "drop_path mismatch"

    # fused residual + DropPath (residual input aliased to the output)
    res = jax.random.normal(k_res, (B, N, D), dtype=jnp.float32)
    ref_fused = res + branch * scale_vals                  # computed before the call
    out_fused = jax.block_until_ready(
        drop_path_add(res, branch, drop_prob, k_drop, training=True))
    assert jnp.allclose(out_fused, ref_fused, atol=1e-6), "drop_path_add mismatch"

    # plain-JAX variant used inside larger jitted graphs
    out_xla = jax.block_until_ready(
        drop_path_add_xla(x, branch, drop_prob, k_drop, training=True))
    assert jnp.allclose(out_xla, x + branch * scale_vals, atol=1e-6), "xla path mismatch"

    # bf16, 128-multiple hidden dim (natural layout, 16-row sublane packing)
    xb = jax.random.normal(k_xb, (2, 8, 256), dtype=jnp.bfloat16)
    bb = jax.random.normal(k_bb, (2, 8, 256), dtype=jnp.bfloat16)
    ref_bf16 = (xb.astype(jnp.float32)
                + bb.astype(jnp.float32) * scale_vals).astype(jnp.bfloat16)
    out_bf16 = jax.block_until_ready(
        drop_path_add(xb, bb, drop_prob, k_drop, training=True))
    assert jnp.allclose(out_bf16.astype(jnp.float32),
                        ref_bf16.astype(jnp.float32), atol=1e-2), "bf16 mismatch"

    # misaligned hidden dim + multi-tile non-divisible grid (boundary masking)
    x2 = jax.random.normal(k_x2, (2, 13, 100), dtype=jnp.float32)
    out2 = jax.block_until_ready(
        drop_path(x2, drop_prob, k_drop2, training=True, block_bytes=6000))
    rand2 = jax.random.uniform(k_drop2, (2,), dtype=jnp.float32)
    ref2 = x2 * (jnp.floor(keep_prob + rand2) / keep_prob).reshape(2, 1, 1)
    assert jnp.allclose(out2, ref2, atol=1e-6), "tiled drop_path mismatch"

    # eval mode: identity / plain residual add
    assert jnp.array_equal(drop_path(x, drop_prob, k_drop, training=False), x)
    assert jnp.allclose(
        drop_path_add(x, branch, drop_prob, k_drop, training=False), x + branch)

    print("KERNEL_OK")
</pallas_src>

<mosaic_0001>
module attributes {stable_mosaic.version = 11 : i64} {
  func.func @_drop_path_kernel(%arg0: i32, %arg1: memref<16x1xf32, #tpu.memory_space<vmem>>, %arg2: memref<16x32xf32, #tpu.memory_space<vmem>>, %arg3: memref<16x32xf32, #tpu.memory_space<vmem>>) attributes {dimension_semantics = [#tpu.dimension_semantics<parallel>], iteration_bounds = array<i64: 1>, scalar_prefetch = 0 : i64, scratch_operands = 0 : i64, tpu.core_type = #tpu.core_type<tc>, window_params = [{transform_indices = @transform_0, window_bounds = array<i64: 16, 1>}, {transform_indices = @transform_1, window_bounds = array<i64: 16, 32>}, {transform_indices = @transform_2, window_bounds = array<i64: 16, 32>}]} {
    %c0 = arith.constant 0 : index
    %c0_0 = arith.constant 0 : index
    %0 = vector.load %arg2[%c0, %c0_0] : memref<16x32xf32, #tpu.memory_space<vmem>>, vector<16x32xf32>
    %c0_1 = arith.constant 0 : index
    %c0_2 = arith.constant 0 : index
    %1 = vector.load %arg1[%c0_1, %c0_2] : memref<16x1xf32, #tpu.memory_space<vmem>>, vector<16x1xf32>
    %2 = vector.broadcast %1 : vector<16x1xf32> to vector<16x32xf32>
    %3 = arith.mulf %0, %2 : vector<16x32xf32>
    %c0_3 = arith.constant 0 : index
    %c0_4 = arith.constant 0 : index
    %4 = vector.load %arg3[%c0_3, %c0_4] : memref<16x32xf32, #tpu.memory_space<vmem>>, vector<16x32xf32>
    tpu.vector_store %arg3[%c0_3, %c0_4], %3 {strides = array<i32>} : memref<16x32xf32, #tpu.memory_space<vmem>>, vector<16x32xf32>,
    return
  }
  func.func @transform_0(%arg0: i32) -> (i32, i32) {
    %c0_i32 = arith.constant 0 : i32
    %c0_i32_0 = arith.constant 0 : i32
    return %arg0, %c0_i32 : i32, i32
  }
  func.func @transform_1(%arg0: i32) -> (i32, i32) {
    %c0_i32 = arith.constant 0 : i32
    %c0_i32_0 = arith.constant 0 : i32
    return %arg0, %c0_i32 : i32, i32
  }
  func.func @transform_2(%arg0: i32) -> (i32, i32) {
    %c0_i32 = arith.constant 0 : i32
    %c0_i32_0 = arith.constant 0 : i32
    return %arg0, %c0_i32 : i32, i32
  }
}

</mosaic_0001>

<llo_original>
// kernel: tpu_custom_call.1
$region0: #{tpu_custom_call.1}
  #allocation0 [shape = 'u32[]', space=smem, size = 0x4, offset = 0x4, fixed_abs, tag = 'smem constant byte address 0x4 - core index']
  #allocation1 [shape = 'u32[144,128]{1,0:T(1,128)}', space=vmem, size = 0x12000, scoped, tag = 'internal scratch']
  %s0 = inlined_call_operand.vmem [shape: f32[16,1], index: 0, kind: input, shape index: {}]
  %s1 = inlined_call_operand.vmem [shape: f32[16,32], index: 1, kind: input, shape index: {}]
  %s2 = inlined_call_operand.hbm [shape: f32[16,32], index: 2, kind: output, shape index: {}]
  %s3 = sld [smem:[#allocation0]]
  $region18: #{tpu_custom_call.1} parent=0
    _
  %s5 = ssub.s32 1, %s3
  %s6 = scalar_select 0, %s5, %s3
  $region1: #{tpu_custom_call.1} parent=0
    #allocation2 [shape = 'u8[8192]{0}', space=vmem, size = 0x2000, scoped, tag = 'output window, operand 0, single buffered']
    #allocation3 [shape = 's32[1]{0}', space=sflag, size = 0x4, scoped, tag = 'scoped memory for tpu_custom_call.1']
    %7 = vsyncpa [#allocation3], 0
    // Predicated region
    $region2: #{tpu_custom_call.1} parent=1 // pred_check
      _
    $region3: #{tpu_custom_call.1} parent=1 // pred_check_branch
      %9 = sbr.rel (0) target = $region5
    $region4: #{tpu_custom_call.1} parent=1 // pred_region
      _
    $region5: #{tpu_custom_call.1} parent=1 // pred_fallthru
      _
    // Predicated region
    $region6: #{tpu_custom_call.1} parent=1 // pred_check
      _
    $region7: #{tpu_custom_call.1} parent=1 // pred_check_branch
      %11 = sbr.rel (0) target = $region9
    $region8: #{tpu_custom_call.1} parent=1 // pred_region
      _
    $region9: #{tpu_custom_call.1} parent=1 // pred_fallthru
      _
    %v12 = vld [vmem:[%s1] sm:$0xff]
    %v13 = vld [vmem:[%s1 + $0x8] sm:$0xff]
    %v14 = vld [vmem:[%s0] sm:$0xff]
    %v15 = vld [vmem:[%s0 + $0x8] sm:$0xff]
    %17 = vset.pattern.permute.xlu0 0
    %18 = vperm.xlu0 %17, %v14
    %v19 = vpop.permute.xlu0 %18
    %22 = vset.pattern.permute.xlu0 0
    %23 = vperm.xlu0 %22, %v15
    %v24 = vpop.permute.xlu0 %23
    %v26 = vmul.f32 %v12, %v19
    %v27 = vmul.f32 %v13, %v24
    %vm28 = vcmask 261120
    %29 = vst.msk [vmem:[#allocation2] sm:$0xff] %vm28, %v26
    %30 = vst.msk [vmem:[#allocation2 + $0x8] sm:$0xff] %vm28, %v27
    // Predicated region
    $region10: #{tpu_custom_call.1} parent=1 // pred_check
      _
    $region11: #{tpu_custom_call.1} parent=1 // pred_check_branch
      %32 = sbr.rel (0) target = $region13
    $region12: #{tpu_custom_call.1} parent=1 // pred_region
      %s34 = ssub.s32 256, 256
      %35 = vsyncadd [#allocation3], %s34
      %s36 = sshll.u32 [#allocation2], 4
      %s37 = int_to_ptr.vmem [resolvable:$true] %s36
      %42 = dma.vmem_to_hbm [thread:$0]  %s37, 256, %s2, [#allocation3], 128, 128, 8
    $region13: #{tpu_custom_call.1} parent=1 // pred_fallthru
      _
    // Predicated region
    $region14: #{tpu_custom_call.1} parent=1 // pred_check
      _
    $region15: #{tpu_custom_call.1} parent=1 // pred_check_branch
      %44 = sbr.rel (0) target = $region17
    $region16: #{tpu_custom_call.1} parent=1 // pred_region
      %45 = dma.done [#allocation3], 256
    $region17: #{tpu_custom_call.1} parent=1 // pred_fallthru
      _
    %46 = vsyncpa [#allocation3], 1

</llo_original>
